<compile_context>
chip_gen: v6e
topology: v6e:2x2x1
jax: 0.10.0
libtpu: 0.0.40
codegen_flags: <defaults>
</compile_context>

<pallas_src>
import jax
import jax.numpy as jnp
from jax import lax
from jax.experimental import pallas as pl
from jax.experimental.pallas import tpu as pltpu

IN_FEATURES = 64
HIDDEN = 8
PACK = 2                       # batch rows packed per 128-lane row
PACKED_IN = PACK * IN_FEATURES     # 128
PACKED_HID = PACK * HIDDEN         # 16


def _round_up(n, m):
    return ((n + m - 1) // m) * m


def _cdiv(a, b):
    return -(-a // b)


def fcn_kernel(x_ref, w1_ref, b1_ref, w2_ref, b2_ref, o_ref):
    # x:  (TILE_PB, 128)  VMEM  streamed, lane-dense, bf16 (or f32)
    # w1: (128, 16)       VMEM  resident block-diag duplicated fc1 weight
    # b1: (1, 16)         VMEM  resident tiled fc1 bias (f32)
    # w2: (2, 16)         VMEM  resident block-diag fc2 weight (f32)
    # b2: (1, 1)          SMEM  scalar fc2 bias
    # o:  (2, TILE_PB)    VMEM  lane-dense output slab (f32)
    x = x_ref[...]

    # fc1 + ReLU: bf16 (or f32) MXU matmul with f32 accumulation.
    # Columns 0:8 are the hidden units of the even batch row in each packed
    # row, columns 8:16 those of the odd batch row.
    h = jnp.dot(x, w1_ref[...], preferred_element_type=jnp.float32)
    h = jnp.maximum(h + b1_ref[...], 0.0)

    # fc2 computed transposed: (2, 16) contracted with (TILE_PB, 16) on the
    # hidden axis -> (2, TILE_PB).  Keeps the result and the store lane-dense
    # (row 0 = even rows, row 1 = odd rows) instead of a 2-of-128-lane masked
    # column store.
    z = lax.dot_general(
        w2_ref[...], h,
        dimension_numbers=(((1,), (1,)), ((), ())),
        preferred_element_type=jnp.float32,
    )
    z = z + b2_ref[0, 0]

    o_ref[...] = jax.nn.sigmoid(z).astype(o_ref.dtype)


def fcn_forward(x, w1, b1, w2, b2, *, tile_pb=8192,
                compute_dtype=jnp.bfloat16, x_buffers=2):
    """Forward pass of the FCN.

    x:  (B, 64) f32
    w1: (64, 8) f32  (torch fc1 weight, pre-transposed)
    b1: (1, 8)  f32
    w2: (1, 8)  f32  (torch fc2 weight layout)
    b2: (1, 1)  f32
    returns (B, 1) f32 = sigmoid(relu(x @ w1 + b1) @ w2.T + b2)

    tile_pb is the number of *packed* rows (= 2 batch rows each) per grid
    step; it is clamped/balanced to multiples of 128.
    """
    B, D = x.shape
    assert D == IN_FEATURES

    # ---- tile selection ---------------------------------------------------
    pb = _cdiv(B, PACK)                      # packed rows actually needed
    tile_pb = max(128, int(tile_pb))
    n_steps = _cdiv(pb, tile_pb)
    # Give the "parallel" grid axis >=2 steps when the batch is big enough so
    # v7x's two TensorCores both get work; balance tiles to minimize padding.
    if n_steps == 1 and pb >= 256:
        n_steps = 2
    tile_pb = _round_up(max(1, _cdiv(pb, n_steps)), 128)   # lane-dense output
    pb_pad = n_steps * tile_pb
    rows_pad = PACK * pb_pad

    # ---- input prep -------------------------------------------------------
    if rows_pad != B:
        # Zero-padded garbage rows flow through relu/sigmoid harmlessly and
        # are sliced off below.
        x = jnp.pad(x, ((0, rows_pad - B), (0, 0)))
    # Pack two consecutive batch rows into one 128-lane row (pure reshape) and
    # cast to the streaming dtype (bf16 halves HBM read traffic; free if the
    # producer already emits bf16).
    x_packed = x.reshape(pb_pad, PACKED_IN).astype(compute_dtype)

    # Block-diagonal duplicated fc1 weight / tiled bias: packed_row @ w1bd
    # applies fc1 independently to both halves of the packed row.
    zw1 = jnp.zeros((IN_FEATURES, HIDDEN), w1.dtype)
    w1bd = jnp.block([[w1, zw1], [zw1, w1]]).astype(compute_dtype)   # (128, 16)
    b1t = jnp.concatenate([b1, b1], axis=1).astype(jnp.float32)      # (1, 16)
    zw2 = jnp.zeros((1, HIDDEN), w2.dtype)
    w2bd = jnp.block([[w2, zw2], [zw2, w2]]).astype(jnp.float32)     # (2, 16)
    b2s = b2.reshape(1, 1).astype(jnp.float32)

    # Optional deeper pipelining on the streamed x block (v7x: try 3 only
    # after profiling shows exposed DMA at step boundaries).
    x_spec_kw = {} if x_buffers == 2 else {"pipeline_mode": pl.Buffered(x_buffers)}

    grid = (pb_pad // tile_pb,)

    out = pl.pallas_call(
        fcn_kernel,
        out_shape=jax.ShapeDtypeStruct((PACK, pb_pad), jnp.float32),
        grid=grid,
        in_specs=[
            pl.BlockSpec((tile_pb, PACKED_IN), lambda i: (i, 0), **x_spec_kw),  # x: streamed
            pl.BlockSpec((PACKED_IN, PACKED_HID), lambda i: (0, 0)),            # w1bd: resident
            pl.BlockSpec((1, PACKED_HID), lambda i: (0, 0)),                    # b1: resident
            pl.BlockSpec((PACK, PACKED_HID), lambda i: (0, 0)),                 # w2bd: resident
            pl.BlockSpec(memory_space=pltpu.MemorySpace.SMEM),                  # b2: scalar
        ],
        out_specs=pl.BlockSpec((PACK, tile_pb), lambda i: (0, i)),
        compiler_params=pltpu.CompilerParams(
            dimension_semantics=("parallel",),
            vmem_limit_bytes=32 * 1024 * 1024,
        ),
    )(x_packed, w1bd, b1t, w2bd, b2s)

    # (2, pb_pad): row 0 = even batch rows, row 1 = odd batch rows.
    # De-interleave back to batch order and drop the padding.
    return out.T.reshape(rows_pad, 1)[:B]


def init_params(key):
    """Deterministic init matching PyTorch Linear shapes."""
    k1, k2, k3, k4 = jax.random.split(key, 4)
    # fc1: Linear(64, 8) -> torch weight (8, 64); stored transposed as (64, 8).
    bound1 = 1.0 / jnp.sqrt(64.0)
    w1 = jax.random.uniform(k1, (64, 8), jnp.float32, -bound1, bound1)
    b1 = jax.random.uniform(k2, (1, 8), jnp.float32, -bound1, bound1)
    # fc2: Linear(8, 1) -> torch weight (1, 8); kept in torch layout.
    bound2 = 1.0 / jnp.sqrt(8.0)
    w2 = jax.random.uniform(k3, (1, 8), jnp.float32, -bound2, bound2)
    b2 = jax.random.uniform(k4, (1, 1), jnp.float32, -bound2, bound2)
    return w1, b1, w2, b2


def _reference(x, w1, b1, w2, b2):
    h = jnp.maximum(
        jnp.dot(x, w1, precision=lax.Precision.HIGHEST) + b1, 0.0)
    return jax.nn.sigmoid(
        jnp.dot(h, w2.T, precision=lax.Precision.HIGHEST) + b2)


if __name__ == "__main__":
    key = jax.random.PRNGKey(0)
    kx, kx2, kp = jax.random.split(key, 3)
    w1, b1, w2, b2 = init_params(kp)

    # Small smoke test (single grid step), default bf16 streaming path.
    B = 8
    x = jax.random.normal(kx, (B, IN_FEATURES), jnp.float32)
    out = jax.block_until_ready(fcn_forward(x, w1, b1, w2, b2))
    ref = _reference(x, w1, b1, w2, b2)
    assert out.shape == (B, 1)
    assert jnp.allclose(out, ref, atol=2e-2), "bf16 path mismatch (small B)"

    # Multi-tile + odd batch + padding path (forces >1 grid step).
    B2 = 301
    x2 = jax.random.normal(kx2, (B2, IN_FEATURES), jnp.float32)
    out2 = jax.block_until_ready(fcn_forward(x2, w1, b1, w2, b2, tile_pb=128))
    ref2 = _reference(x2, w1, b1, w2, b2)
    assert out2.shape == (B2, 1)
    assert jnp.allclose(out2, ref2, atol=2e-2), "bf16 path mismatch (multi-tile)"

    # f32 streaming path (tighter tolerance).
    out3 = jax.block_until_ready(
        fcn_forward(x2, w1, b1, w2, b2, tile_pb=128, compute_dtype=jnp.float32))
    assert out3.shape == (B2, 1)
    assert jnp.allclose(out3, ref2, atol=1e-3), "f32 path mismatch"

    print("KERNEL_OK")
</pallas_src>

<mosaic_0001>
module attributes {stable_mosaic.version = 11 : i64} {
  func.func @fcn_kernel(%arg0: i32, %arg1: memref<128x128xbf16, #tpu.memory_space<vmem>>, %arg2: memref<128x16xbf16, #tpu.memory_space<vmem>>, %arg3: memref<1x16xf32, #tpu.memory_space<vmem>>, %arg4: memref<2x16xf32, #tpu.memory_space<vmem>>, %arg5: memref<1x1xf32, #tpu.memory_space<smem>>, %arg6: memref<2x128xf32, #tpu.memory_space<vmem>>) attributes {dimension_semantics = [#tpu.dimension_semantics<parallel>], iteration_bounds = array<i64: 1>, scalar_prefetch = 0 : i64, scratch_operands = 0 : i64, tpu.core_type = #tpu.core_type<tc>, window_params = [{transform_indices = @transform_0, window_bounds = array<i64: 128, 128>}, {pipeline_mode = #tpu.pipeline_mode<synchronous>, transform_indices = @transform_1, window_bounds = array<i64: 128, 16>}, {pipeline_mode = #tpu.pipeline_mode<synchronous>, transform_indices = @transform_2, window_bounds = array<i64: 1, 16>}, {pipeline_mode = #tpu.pipeline_mode<synchronous>, transform_indices = @transform_3, window_bounds = array<i64: 2, 16>}, {transform_indices = @transform_4, window_bounds = array<i64: 1, 1>}, {transform_indices = @transform_5, window_bounds = array<i64: 2, 128>}]} {
    %c0 = arith.constant 0 : index
    %c0_0 = arith.constant 0 : index
    %0 = vector.load %arg1[%c0, %c0_0] : memref<128x128xbf16, #tpu.memory_space<vmem>>, vector<128x128xbf16>
    %c0_1 = arith.constant 0 : index
    %c0_2 = arith.constant 0 : index
    %1 = vector.load %arg2[%c0_1, %c0_2] : memref<128x16xbf16, #tpu.memory_space<vmem>>, vector<128x16xbf16>
    %cst = arith.constant dense<0.000000e+00> : vector<128x16xf32>
    %2 = tpu.matmul %0, %1, %cst {dimension_numbers = #tpu.dot_dimension_numbers<[1], [0], [0], [1], [0, 0, 1, 1], [], []>} : vector<128x128xbf16>, vector<128x16xbf16>, vector<128x16xf32> -> vector<128x16xf32>
    %c0_3 = arith.constant 0 : index
    %c0_4 = arith.constant 0 : index
    %3 = vector.load %arg3[%c0_3, %c0_4] : memref<1x16xf32, #tpu.memory_space<vmem>>, vector<1x16xf32>
    %4 = vector.broadcast %3 : vector<1x16xf32> to vector<128x16xf32>
    %5 = arith.addf %2, %4 : vector<128x16xf32>
    %cst_5 = arith.constant 0.000000e+00 : f32
    %6 = vector.broadcast %cst_5 : f32 to vector<128x16xf32>
    %7 = arith.maximumf %5, %6 : vector<128x16xf32>
    %c0_6 = arith.constant 0 : index
    %c0_7 = arith.constant 0 : index
    %8 = vector.load %arg4[%c0_6, %c0_7] : memref<2x16xf32, #tpu.memory_space<vmem>>, vector<2x16xf32>
    %cst_8 = arith.constant dense<0.000000e+00> : vector<2x128xf32>
    %9 = tpu.matmul %8, %7, %cst_8 {dimension_numbers = #tpu.dot_dimension_numbers<[1], [1], [0], [0], [0, 0, 1, 0], [], []>} : vector<2x16xf32>, vector<128x16xf32>, vector<2x128xf32> -> vector<2x128xf32>
    %c0_9 = arith.constant 0 : index
    %c0_10 = arith.constant 0 : index
    %10 = memref.load %arg5[%c0_9, %c0_10] : memref<1x1xf32, #tpu.memory_space<smem>>
    %11 = vector.broadcast %10 : f32 to vector<2x128xf32>
    %12 = arith.addf %9, %11 : vector<2x128xf32>
    %13 = arith.negf %12 : vector<2x128xf32>
    %14 = math.exp %13 : vector<2x128xf32>
    %cst_11 = arith.constant 1.000000e+00 : f32
    %15 = vector.broadcast %cst_11 : f32 to vector<2x128xf32>
    %16 = arith.addf %15, %14 : vector<2x128xf32>
    %17 = arith.divf %15, %16 : vector<2x128xf32>
    %c0_12 = arith.constant 0 : index
    %c0_13 = arith.constant 0 : index
    %18 = vector.load %arg6[%c0_12, %c0_13] : memref<2x128xf32, #tpu.memory_space<vmem>>, vector<2x128xf32>
    tpu.vector_store %arg6[%c0_12, %c0_13], %17 {strides = array<i32>} : memref<2x128xf32, #tpu.memory_space<vmem>>, vector<2x128xf32>,
    return
  }
  func.func @transform_0(%arg0: i32) -> (i32, i32) {
    %c0_i32 = arith.constant 0 : i32
    %c0_i32_0 = arith.constant 0 : i32
    return %arg0, %c0_i32 : i32, i32
  }
  func.func @transform_1(%arg0: i32) -> (i32, i32) {
    %c0_i32 = arith.constant 0 : i32
    %c0_i32_0 = arith.constant 0 : i32
    %c0_i32_1 = arith.constant 0 : i32
    return %c0_i32, %c0_i32_0 : i32, i32
  }
  func.func @transform_2(%arg0: i32) -> (i32, i32) {
    %c0_i32 = arith.constant 0 : i32
    %c0_i32_0 = arith.constant 0 : i32
    %c0_i32_1 = arith.constant 0 : i32
    return %c0_i32, %c0_i32_0 : i32, i32
  }
  func.func @transform_3(%arg0: i32) -> (i32, i32) {
    %c0_i32 = arith.constant 0 : i32
    %c0_i32_0 = arith.constant 0 : i32
    %c0_i32_1 = arith.constant 0 : i32
    return %c0_i32, %c0_i32_0 : i32, i32
  }
  func.func @transform_4(%arg0: i32) -> (i32, i32) {
    %c0_i32 = arith.constant 0 : i32
    %c0_i32_0 = arith.constant 0 : i32
    %c0_i32_1 = arith.constant 0 : i32
    return %c0_i32, %c0_i32_0 : i32, i32
  }
  func.func @transform_5(%arg0: i32) -> (i32, i32) {
    %c0_i32 = arith.constant 0 : i32
    %c0_i32_0 = arith.constant 0 : i32
    return %c0_i32, %arg0 : i32, i32
  }
}

</mosaic_0001>

<llo_original>
// kernel: tpu_custom_call.1
$region0: #{tpu_custom_call.1}
  #allocation0 [shape = 'u32[]', space=smem, size = 0x4, offset = 0x4, fixed_abs, tag = 'smem constant byte address 0x4 - core index']
  #allocation1 [shape = 'u32[144,128]{1,0:T(1,128)}', space=vmem, size = 0x12000, scoped, tag = 'internal scratch']
  #allocation2 [shape = 'f32[1,1]{1,0:T(1,128)S(6)}', space=smem, size = 0x200, scoped, tag = 'scoped memory for tpu_custom_call.1']
  %s0 = inlined_call_operand.vmem [shape: bf16[128,128], index: 0, kind: input, shape index: {}]
  %s1 = inlined_call_operand.vmem [shape: bf16[128,16], index: 1, kind: input, shape index: {}]
  %s2 = inlined_call_operand.vmem [shape: f32[1,16], index: 2, kind: input, shape index: {}]
  %s3 = inlined_call_operand.vmem [shape: f32[2,16], index: 3, kind: input, shape index: {}]
  %s4 = inlined_call_operand.<no memory space> [shape: f32[1,1], index: 4, kind: input, shape index: {}]
  %s5 = inlined_call_operand.hbm [shape: f32[2,128], index: 5, kind: output, shape index: {}]
  %s6 = sld [smem:[#allocation0]]
  $region30: #{tpu_custom_call.1} parent=0
    _
  %s8 = ssub.s32 1, %s6
  %s9 = scalar_select 0, %s8, %s6
  %10 = sst [smem:[#allocation2]] %s4
  $region1: #{tpu_custom_call.1} parent=0
    #allocation3 [shape = 'u8[1024]{0}', space=vmem, size = 0x400, scoped, tag = 'output window, operand 0, single buffered']
    #allocation4 [shape = 's32[1]{0}', space=sflag, size = 0x4, scoped, tag = 'scoped memory for tpu_custom_call.1']
    %11 = vsyncpa [#allocation4], 0
    // Predicated region
    $region2: #{tpu_custom_call.1} parent=1 // pred_check
      _
    $region3: #{tpu_custom_call.1} parent=1 // pred_check_branch
      %13 = sbr.rel (0) target = $region5
    $region4: #{tpu_custom_call.1} parent=1 // pred_region
      _
    $region5: #{tpu_custom_call.1} parent=1 // pred_fallthru
      _
    // Predicated region
    $region6: #{tpu_custom_call.1} parent=1 // pred_check
      _
    $region7: #{tpu_custom_call.1} parent=1 // pred_check_branch
      %15 = sbr.rel (0) target = $region9
    $region8: #{tpu_custom_call.1} parent=1 // pred_region
      _
    $region9: #{tpu_custom_call.1} parent=1 // pred_fallthru
      _
    // Predicated region
    $region10: #{tpu_custom_call.1} parent=1 // pred_check
      _
    $region11: #{tpu_custom_call.1} parent=1 // pred_check_branch
      %17 = sbr.rel (0) target = $region13
    $region12: #{tpu_custom_call.1} parent=1 // pred_region
      _
    $region13: #{tpu_custom_call.1} parent=1 // pred_fallthru
      _
    // Predicated region
    $region14: #{tpu_custom_call.1} parent=1 // pred_check
      _
    $region15: #{tpu_custom_call.1} parent=1 // pred_check_branch
      %19 = sbr.rel (0) target = $region17
    $region16: #{tpu_custom_call.1} parent=1 // pred_region
      _
    $region17: #{tpu_custom_call.1} parent=1 // pred_fallthru
      _
    // Predicated region
    $region18: #{tpu_custom_call.1} parent=1 // pred_check
      _
    $region19: #{tpu_custom_call.1} parent=1 // pred_check_branch
      %21 = sbr.rel (0) target = $region21
    $region20: #{tpu_custom_call.1} parent=1 // pred_region
      _
    $region21: #{tpu_custom_call.1} parent=1 // pred_fallthru
      _
    %v23 = vld [vmem:[%s0] sm:$0xf]
    %v24 = vld [vmem:[%s0 + $0x4] sm:$0xf]
    %v25 = vld [vmem:[%s0 + $0x8] sm:$0xf]
    %v26 = vld [vmem:[%s0 + $0xc] sm:$0xf]
    %v27 = vld [vmem:[%s0 + $0x10] sm:$0xf]
    %v28 = vld [vmem:[%s0 + $0x14] sm:$0xf]
    %v29 = vld [vmem:[%s0 + $0x18] sm:$0xf]
    %v30 = vld [vmem:[%s0 + $0x1c] sm:$0xf]
    %v31 = vld [vmem:[%s0 + $0x20] sm:$0xf]
    %v32 = vld [vmem:[%s0 + $0x24] sm:$0xf]
    %v33 = vld [vmem:[%s0 + $0x28] sm:$0xf]
    %v34 = vld [vmem:[%s0 + $0x2c] sm:$0xf]
    %v35 = vld [vmem:[%s0 + $0x30] sm:$0xf]
    %v36 = vld [vmem:[%s0 + $0x34] sm:$0xf]
    %v37 = vld [vmem:[%s0 + $0x38] sm:$0xf]
    %v38 = vld [vmem:[%s0 + $0x3c] sm:$0xf]
    %v39 = vld [vmem:[%s1] sm:$0xf]
    %v40 = vld [vmem:[%s1 + $0x4] sm:$0xf]
    %v41 = vld [vmem:[%s1 + $0x8] sm:$0xf]
    %v42 = vld [vmem:[%s1 + $0xc] sm:$0xf]
    %v43 = vld [vmem:[%s1 + $0x10] sm:$0xf]
    %v44 = vld [vmem:[%s1 + $0x14] sm:$0xf]
    %v45 = vld [vmem:[%s1 + $0x18] sm:$0xf]
    %v46 = vld [vmem:[%s1 + $0x1c] sm:$0xf]
    %v47 = vld [vmem:[%s1 + $0x20] sm:$0xf]
    %v48 = vld [vmem:[%s1 + $0x24] sm:$0xf]
    %v49 = vld [vmem:[%s1 + $0x28] sm:$0xf]
    %v50 = vld [vmem:[%s1 + $0x2c] sm:$0xf]
    %v51 = vld [vmem:[%s1 + $0x30] sm:$0xf]
    %v52 = vld [vmem:[%s1 + $0x34] sm:$0xf]
    %v53 = vld [vmem:[%s1 + $0x38] sm:$0xf]
    %v54 = vld [vmem:[%s1 + $0x3c] sm:$0xf]
    %v55 = vld [vmem:[%s2] sm:$0x1]
    %v57 = vlaneseq
    %v58 = vshrl.u32 %v57, 7
    %v59 = vsub.s32 0, %v58
    %v60 = vrot.slane %v55, %v59
    %v78 = vunpack.c.l.b16 %v23
    %v79 = vunpack.c.l.b16 %v24
    %v80 = vunpack.c.l.b16 %v25
    %v81 = vunpack.c.l.b16 %v26
    %v82 = vunpack.c.l.b16 %v27
    %v83 = vunpack.c.l.b16 %v28
    %v84 = vunpack.c.l.b16 %v29
    %v85 = vunpack.c.l.b16 %v30
    %v86 = vunpack.c.l.b16 %v31
    %v87 = vunpack.c.l.b16 %v32
    %v88 = vunpack.c.l.b16 %v33
    %v89 = vunpack.c.l.b16 %v34
    %v90 = vunpack.c.l.b16 %v35
    %v91 = vunpack.c.l.b16 %v36
    %v92 = vunpack.c.l.b16 %v37
    %v93 = vunpack.c.l.b16 %v38
    %v94 = vpack.c.b16 %v79, %v78
    %v95 = vpack.c.b16 %v81, %v80
    %v96 = vpack.c.b16 %v83, %v82
    %v97 = vpack.c.b16 %v85, %v84
    %v98 = vpack.c.b16 %v87, %v86
    %v99 = vpack.c.b16 %v89, %v88
    %v100 = vpack.c.b16 %v91, %v90
    %v101 = vpack.c.b16 %v93, %v92
    %v126 = vunpack.c.l.b16 %v39
    %v127 = vunpack.c.l.b16 %v40
    %v128 = vunpack.c.l.b16 %v41
    %v129 = vunpack.c.l.b16 %v42
    %v130 = vunpack.c.l.b16 %v43
    %v131 = vunpack.c.l.b16 %v44
    %v132 = vunpack.c.l.b16 %v45
    %v133 = vunpack.c.l.b16 %v46
    %v134 = vunpack.c.l.b16 %v47
    %v135 = vunpack.c.l.b16 %v48
    %v136 = vunpack.c.l.b16 %v49
    %v137 = vunpack.c.l.b16 %v50
    %v138 = vunpack.c.l.b16 %v51
    %v139 = vunpack.c.l.b16 %v52
    %v140 = vunpack.c.l.b16 %v53
    %v141 = vunpack.c.l.b16 %v54
    %v142 = vpack.c.b16 %v127, %v126
    %v143 = vpack.c.b16 %v129, %v128
    %v144 = vpack.c.b16 %v131, %v130
    %v145 = vpack.c.b16 %v133, %v132
    %v146 = vpack.c.b16 %v135, %v134
    %v147 = vpack.c.b16 %v137, %v136
    %v148 = vpack.c.b16 %v139, %v138
    %v149 = vpack.c.b16 %v141, %v140
    %158 = vmatprep.subr.bf16.mxu0 0
    %159 = vmatpush1.bf16.msra.mxu0 %v149
    %160 = vmatprep.subr.bf16.mxu0 0
    %161 = vmatpush1.bf16.msra.mxu0 %v148
    %162 = vmatprep.subr.bf16.mxu0 0
    %163 = vmatpush1.bf16.msra.mxu0 %v147
    %164 = vmatprep.subr.bf16.mxu0 0
    %165 = vmatpush1.bf16.msra.mxu0 %v146
    %166 = vmatprep.subr.bf16.mxu0 0
    %167 = vmatpush1.bf16.msra.mxu0 %v145
    %168 = vmatprep.subr.bf16.mxu0 0
    %169 = vmatpush1.bf16.msra.mxu0 %v144
    %170 = vmatprep.subr.bf16.mxu0 0
    %171 = vmatpush1.bf16.msra.mxu0 %v143
    %172 = vmatprep.subr.bf16.mxu0 0
    %173 = vmatpush1.bf16.msra.mxu0 %v142
    %174 = vmatprep.subr.bf16.mxu0 0
    %175 = vmatpush2.bf16.msra.mxu0 0
    %176 = vmatprep.subr.bf16.mxu0 0
    %177 = vmatpush2.bf16.msra.mxu0 0
    %178 = vmatprep.subr.bf16.mxu0 0
    %179 = vmatpush2.bf16.msra.mxu0 0
    %180 = vmatprep.subr.bf16.mxu0 0
    %181 = vmatpush2.bf16.msra.mxu0 0
    %182 = vmatprep.subr.bf16.mxu0 0
    %183 = vmatpush2.bf16.msra.mxu0 0
    %184 = vmatprep.subr.bf16.mxu0 0
    %185 = vmatpush2.bf16.msra.mxu0 0
    %186 = vmatprep.subr.bf16.mxu0 0
    %187 = vmatpush2.bf16.msra.mxu0 0
    %188 = vmatprep.subr.bf16.mxu0 0
    %189 = vmatpush2.bf16.msra.mxu0 0
    %190 = vmatprep.mubr.bf16.mxu0 0
    %191 = vmatmul.mubr.bf16.gmra.mxu0 %v94
    %v192 = vpop.f32.mrf.mxu0
    %v193 = vadd.f32 %v60, %v192
    %v194 = vpop.f32.mrf.mxu0
    %v195 = vpop.f32.mrf.mxu0
    %v196 = vadd.f32 %v60, %v195
    %v197 = vpop.f32.mrf.mxu0
    %198 = vmatprep.mubr.bf16.mxu0 0
    %199 = vmatmul.mubr.bf16.gmra.mxu0 %v95
    %v200 = vpop.f32.mrf.mxu0
    %v201 = vadd.f32 %v60, %v200
    %v202 = vpop.f32.mrf.mxu0
    %v203 = vpop.f32.mrf.mxu0
    %v204 = vadd.f32 %v60, %v203
    %v205 = vpop.f32.mrf.mxu0
    %206 = vmatprep.mubr.bf16.mxu0 0
    %207 = vmatmul.mubr.bf16.gmra.mxu0 %v96
    %v208 = vpop.f32.mrf.mxu0
    %v209 = vadd.f32 %v60, %v208
    %v210 = vpop.f32.mrf.mxu0
    %v211 = vpop.f32.mrf.mxu0
    %v212 = vadd.f32 %v60, %v211
    %v213 = vpop.f32.mrf.mxu0
    %214 = vmatprep.mubr.bf16.mxu0 0
    %215 = vmatmul.mubr.bf16.gmra.mxu0 %v97
    %v216 = vpop.f32.mrf.mxu0
    %v217 = vadd.f32 %v60, %v216
    %v218 = vpop.f32.mrf.mxu0
    %v219 = vpop.f32.mrf.mxu0
    %v220 = vadd.f32 %v60, %v219
    %v221 = vpop.f32.mrf.mxu0
    %222 = vmatprep.mubr.bf16.mxu0 0
    %223 = vmatmul.mubr.bf16.gmra.mxu0 %v98
    %v224 = vpop.f32.mrf.mxu0
    %v225 = vadd.f32 %v60, %v224
    %v226 = vpop.f32.mrf.mxu0
    %v227 = vpop.f32.mrf.mxu0
    %v228 = vadd.f32 %v60, %v227
    %v229 = vpop.f32.mrf.mxu0
    %230 = vmatprep.mubr.bf16.mxu0 0
    %231 = vmatmul.mubr.bf16.gmra.mxu0 %v99
    %v232 = vpop.f32.mrf.mxu0
    %v233 = vadd.f32 %v60, %v232
    %v234 = vpop.f32.mrf.mxu0
    %v235 = vpop.f32.mrf.mxu0
    %v236 = vadd.f32 %v60, %v235
    %v237 = vpop.f32.mrf.mxu0
    %238 = vmatprep.mubr.bf16.mxu0 0
    %239 = vmatmul.mubr.bf16.gmra.mxu0 %v100
    %v240 = vpop.f32.mrf.mxu0
    %v241 = vadd.f32 %v60, %v240
    %v242 = vpop.f32.mrf.mxu0
    %v243 = vpop.f32.mrf.mxu0
    %v244 = vadd.f32 %v60, %v243
    %v245 = vpop.f32.mrf.mxu0
    %246 = vmatprep.mubr.bf16.mxu0 0
    %247 = vmatmul.mubr.bf16.gmra.mxu0 %v101
    %v248 = vpop.f32.mrf.mxu0
    %v249 = vadd.f32 %v60, %v248
    %v250 = vpop.f32.mrf.mxu0
    %v251 = vpop.f32.mrf.mxu0
    %v252 = vadd.f32 %v60, %v251
    %v253 = vpop.f32.mrf.mxu0
    %254 = vdwg.mxu0
    %v255 = vmax.f32 %v193, 0.0
    %v256 = vmax.f32 %v196, 0.0
    %v257 = vmax.f32 %v201, 0.0
    %v258 = vmax.f32 %v204, 0.0
    %v259 = vmax.f32 %v209, 0.0
    %v260 = vmax.f32 %v212, 0.0
    %v261 = vmax.f32 %v217, 0.0
    %v262 = vmax.f32 %v220, 0.0
    %v263 = vmax.f32 %v225, 0.0
    %v264 = vmax.f32 %v228, 0.0
    %v265 = vmax.f32 %v233, 0.0
    %v266 = vmax.f32 %v236, 0.0
    %v267 = vmax.f32 %v241, 0.0
    %v268 = vmax.f32 %v244, 0.0
    %v269 = vmax.f32 %v249, 0.0
    %v270 = vmax.f32 %v252, 0.0
    %v271 = vld [vmem:[%s3] sm:$0x3]
    %s272 = sld [smem:[#allocation2]]
    %v273 = vstv %s272
    %vm274 = vcmask 130048
    %v276 = vsel %vm274, %v271, 0
    %v279 = vsel %vm274, %v255, 0
    %v282 = vsel %vm274, %v256, 0
    %v285 = vsel %vm274, %v257, 0
    %v288 = vsel %vm274, %v258, 0
    %v291 = vsel %vm274, %v259, 0
    %v294 = vsel %vm274, %v260, 0
    %v297 = vsel %vm274, %v261, 0
    %v300 = vsel %vm274, %v262, 0
    %v303 = vsel %vm274, %v263, 0
    %v306 = vsel %vm274, %v264, 0
    %v309 = vsel %vm274, %v265, 0
    %v312 = vsel %vm274, %v266, 0
    %v315 = vsel %vm274, %v267, 0
    %v318 = vsel %vm274, %v268, 0
    %v321 = vsel %vm274, %v269, 0
    %v324 = vsel %vm274, %v270, 0
    %326 = vmatprep.subr.mxu0 0.0
    %327 = vmatpush1.xpose.msra.mxu0 %v324
    %328 = vmatprep.subr.mxu0 0.0
    %329 = vmatpush1.xpose.msra.mxu0 %v321
    %330 = vmatprep.subr.mxu0 0.0
    %331 = vmatpush1.xpose.msra.mxu0 %v318
    %332 = vmatprep.subr.mxu0 0.0
    %333 = vmatpush1.xpose.msra.mxu0 %v315
    %334 = vmatprep.subr.mxu0 0.0
    %335 = vmatpush1.xpose.msra.mxu0 %v312
    %336 = vmatprep.subr.mxu0 0.0
    %337 = vmatpush1.xpose.msra.mxu0 %v309
    %338 = vmatprep.subr.mxu0 0.0
    %339 = vmatpush1.xpose.msra.mxu0 %v306
    %340 = vmatprep.subr.mxu0 0.0
    %341 = vmatpush1.xpose.msra.mxu0 %v303
    %342 = vmatprep.subr.mxu0 0.0
    %343 = vmatpush1.xpose.msra.mxu0 %v300
    %344 = vmatprep.subr.mxu0 0.0
    %345 = vmatpush1.xpose.msra.mxu0 %v297
    %346 = vmatprep.subr.mxu0 0.0
    %347 = vmatpush1.xpose.msra.mxu0 %v294
    %348 = vmatprep.subr.mxu0 0.0
    %349 = vmatpush1.xpose.msra.mxu0 %v291
    %350 = vmatprep.subr.mxu0 0.0
    %351 = vmatpush1.xpose.msra.mxu0 %v288
    %352 = vmatprep.subr.mxu0 0.0
    %353 = vmatpush1.xpose.msra.mxu0 %v285
    %354 = vmatprep.subr.mxu0 0.0
    %355 = vmatpush1.xpose.msra.mxu0 %v282
    %356 = vmatprep.subr.mxu0 0.0
    %357 = vmatpush1.xpose.msra.mxu0 %v279
    %358 = vmatprep.subr.mxu0 0.0
    %359 = vmatpush2.xpose.msra.mxu0 0.0
    %360 = vmatprep.subr.mxu0 0.0
    %361 = vmatpush2.xpose.msra.mxu0 0.0
    %362 = vmatprep.subr.mxu0 0.0
    %363 = vmatpush2.xpose.msra.mxu0 0.0
    %364 = vmatprep.subr.mxu0 0.0
    %365 = vmatpush2.xpose.msra.mxu0 0.0
    %366 = vmatprep.subr.mxu0 0.0
    %367 = vmatpush2.xpose.msra.mxu0 0.0
    %368 = vmatprep.subr.mxu0 0.0
    %369 = vmatpush2.xpose.msra.mxu0 0.0
    %370 = vmatprep.subr.mxu0 0.0
    %371 = vmatpush2.xpose.msra.mxu0 0.0
    %372 = vmatprep.subr.mxu0 0.0
    %373 = vmatpush2.xpose.msra.mxu0 0.0
    %374 = vmatprep.subr.mxu0 0.0
    %375 = vmatpush2.xpose.msra.mxu0 0.0
    %376 = vmatprep.subr.mxu0 0.0
    %377 = vmatpush2.xpose.msra.mxu0 0.0
    %378 = vmatprep.subr.mxu0 0.0
    %379 = vmatpush2.xpose.msra.mxu0 0.0
    %380 = vmatprep.subr.mxu0 0.0
    %381 = vmatpush2.xpose.msra.mxu0 0.0
    %382 = vmatprep.subr.mxu0 0.0
    %383 = vmatpush2.xpose.msra.mxu0 0.0
    %384 = vmatprep.subr.mxu0 0.0
    %385 = vmatpush2.xpose.msra.mxu0 0.0
    %386 = vmatprep.subr.mxu0 0.0
    %387 = vmatpush2.xpose.msra.mxu0 0.0
    %388 = vmatprep.subr.mxu0 0.0
    %389 = vmatpush2.xpose.msra.mxu0 0.0
    %390 = vmatprep.mubr.f32.mxu0 0.0
    %391 = vmatmul.mubr.f32.gmra.mxu0 %v276
    %v392 = vpop.f32.mrf.mxu0
    %v393 = vadd.f32 %v273, %v392
    %v394 = vpop.f32.mrf.mxu0
    %395 = vdwg.mxu0
    %v396 = vxor.u32 %v393, 2147483648
    %v397 = vmul.f32 %v396, 1.442695
    %v398 = vpow.pop %v397
    %v399 = vadd.f32 %v398, 1.0
    %v400 = vrcp.pop %v399
    %v401 = vmul.f32 1.0, %v400
    %402 = vst [vmem:[#allocation3] sm:$0x3] %v401
    // Predicated region
    $region22: #{tpu_custom_call.1} parent=1 // pred_check
      _
    $region23: #{tpu_custom_call.1} parent=1 // pred_check_branch
      %404 = sbr.rel (0) target = $region25
    $region24: #{tpu_custom_call.1} parent=1 // pred_region
      %s406 = ssub.s32 32, 32
      %407 = vsyncadd [#allocation4], %s406
      %s409 = sshll.u32 [#allocation3], 4
      %s410 = int_to_ptr.vmem [resolvable:$true] %s409
      %412 = dma.vmem_to_hbm [thread:$0]  %s410, 32, %s5, [#allocation4]
    $region25: #{tpu_custom_call.1} parent=1 // pred_fallthru
      _
    // Predicated region
    $region26: #{tpu_custom_call.1} parent=1 // pred_check
      _
    $region27: #{tpu_custom_call.1} parent=1 // pred_check_branch
      %414 = sbr.rel (0) target = $region29
    $region28: #{tpu_custom_call.1} parent=1 // pred_region
      %415 = dma.done [#allocation4], 32
    $region29: #{tpu_custom_call.1} parent=1 // pred_fallthru
      _
    %416 = vsyncpa [#allocation4], 1

</llo_original>
